<compile_context>
chip_gen: v7x
topology: tpu7x:2x2x1
jax: 0.10.0
libtpu: 0.0.40
codegen_flags: <defaults>
</compile_context>

<pallas_src>
import math
import functools

import jax
import jax.numpy as jnp
from jax import lax
from jax.experimental import pallas as pl
from jax.experimental.pallas import tpu as pltpu


# ----------------------------------------------------------------------------
# Kernel: in-VMEM one-hot build -> MXU linear -> *sqrt(C) -> +pos -> LayerNorm
# ----------------------------------------------------------------------------
def _msa_emb_kernel(ids_ref, pos_ref, w_ref, wb_ref, g_ref, beta_ref, o_ref,
                    *, n_groups, scale, eps, seq_len, compute_dtype):
    # ids_ref : (TM, G+2) int32  -- cols [0:G] one-hot targets (24*g offsets
    #                               pre-added on host); cols [G:G+2] boundary.
    # pos_ref : (L, C)  f32      -- positional embedding + bias*sqrt(C), per batch.
    # w_ref   : (Dp, C) compute_dtype -- zero-padded one-hot part of the weight.
    # wb_ref  : (2, C)  f32      -- boundary rows of the weight (exact f32 path).
    # g_ref   : (1, C)  f32      -- layernorm gamma
    # beta_ref: (1, C)  f32      -- layernorm beta
    # o_ref   : (TM, C) f32
    tm = ids_ref.shape[0]
    dp = w_ref.shape[0]
    C = o_ref.shape[-1]

    ids = ids_ref[...]                                           # (TM, G+2) int32
    lane = lax.broadcasted_iota(jnp.int32, (1, dp), 1)           # (1, Dp), broadcast

    # One-hot as boolean ORs; one convert at the end (values 0/1 exact in bf16).
    m = lane == ids[:, 0:1]
    for g in range(1, n_groups):
        m = m | (lane == ids[:, g:g + 1])
    one = jnp.ones((), compute_dtype)
    zero = jnp.zeros((), compute_dtype)
    x = jnp.where(m, one, zero)                                  # (TM, Dp)

    # MXU matmul against the padded one-hot weight, f32 accumulation.
    h = jnp.dot(x, w_ref[...], preferred_element_type=jnp.float32)

    # Boundary features applied post-matmul in f32 (cheaper than 2 extra lanes).
    wb = wb_ref[...]                                             # (2, C) f32
    b0 = ids[:, n_groups:n_groups + 1].astype(jnp.float32)       # (TM, 1)
    b1 = ids[:, n_groups + 1:n_groups + 2].astype(jnp.float32)
    h = h + b0 * wb[0:1, :] + b1 * wb[1:2, :]

    # Scale and add positional block (shared by the reps folded MSA rows) via a
    # free (TM, C) -> (reps, L, C) sublane split; bias*scale is folded into pos.
    reps = tm // seq_len
    e = h.reshape(reps, seq_len, C) * scale + pos_ref[...][None, :, :]
    e = e.reshape(tm, C)

    # LayerNorm over C using sum / sum-of-squares (back-to-back XLU reductions).
    s1 = jnp.sum(e, axis=-1, keepdims=True)
    s2 = jnp.sum(e * e, axis=-1, keepdims=True)
    mean = s1 * (1.0 / C)
    var = s2 * (1.0 / C) - mean * mean
    inv = lax.rsqrt(var + eps)
    o_ref[...] = (e - mean) * inv * g_ref[...] + beta_ref[...]


def msa_embeddings_pallas(ids_all, pos_emb, w, b, gamma, beta, *,
                          eps=1e-5, row_target=2048,
                          compute_dtype=jnp.bfloat16,
                          vmem_budget=12 * 1024 * 1024):
    """
    ids_all: (B, K, L, G+2) int32 -- [seq | msa cols (offsets pre-added) | bnd0 | bnd1]
    pos_emb: (B, L, C) float32    -- pe gathered at position_ids
    w: (D_in, C), b/gamma/beta: (C,)   with D_in = 24*G + 2
    returns: (B, K, L, C) float32
    """
    B, K, L, Gt = ids_all.shape
    n_groups = Gt - 2
    d_in = 24 * n_groups + 2
    C = w.shape[1]
    assert w.shape == (d_in, C)
    assert L % 8 == 0, "L must be a multiple of 8"
    scale = math.sqrt(C)

    w = w.astype(jnp.float32)
    # One-hot part of the weight, zero-padded to a 128-lane multiple on D_in,
    # cast to the MXU compute dtype (bf16 by default, f32 for the exact path).
    dp = max(128, ((24 * n_groups + 127) // 128) * 128)
    w_oh = jnp.zeros((dp, C), jnp.float32).at[:24 * n_groups, :].set(
        w[:24 * n_groups]).astype(compute_dtype)
    w_bnd = w[24 * n_groups:, :]                                 # (2, C) f32

    # Fold the (scaled) linear bias into the positional block once on the host.
    pos = pos_emb.astype(jnp.float32) + (b.astype(jnp.float32) * scale)[None, None, :]

    # Rows/step: multiple of L, near row_target, within a per-step VMEM budget
    # (keeps double-buffering intact on v5e's 16 MiB scoped / v7x's 64 MiB VMEM).
    itm = jnp.dtype(compute_dtype).itemsize
    cl = max(C, 128)                                             # lane-padded width

    def step_bytes(tm):
        ids_b = tm * 128 * 4 * 2            # lane-padded int32 ids, double-buffered
        out_b = tm * cl * 4 * 2             # output block, double-buffered
        x_b = tm * dp * itm                 # one-hot temporary
        tmp_b = tm * cl * 4 * 3             # h / e / LN temporaries (rough)
        const_b = (dp * C * itm + (L + 8) * cl * 4) * 2
        return ids_b + out_b + x_b + tmp_b + const_b

    r = max(1, min(K, row_target // L))
    while r > 1 and step_bytes(r * L) > vmem_budget:
        r -= 1
    tm = r * L
    grid = (B, pl.cdiv(K * L, tm))          # robust for prime/awkward K (tail ok)

    ids2 = ids_all.reshape(B, K * L, Gt)    # contiguous reshape, free
    g2 = gamma.reshape(1, C).astype(jnp.float32)
    be2 = beta.reshape(1, C).astype(jnp.float32)

    kernel = functools.partial(_msa_emb_kernel, n_groups=n_groups, scale=scale,
                               eps=eps, seq_len=L, compute_dtype=compute_dtype)

    out = pl.pallas_call(
        kernel,
        out_shape=jax.ShapeDtypeStruct((B, K * L, C), jnp.float32),
        grid_spec=pltpu.PrefetchScalarGridSpec(
            num_scalar_prefetch=0,
            grid=grid,
            in_specs=[
                # ids: (tm, G+2) rows per (b, row-chunk)
                pl.BlockSpec((None, tm, Gt), lambda bi, ji: (bi, ji, 0)),
                # positional block: (L, C) per batch row, constant across ji
                pl.BlockSpec((None, L, C), lambda bi, ji: (bi, 0, 0)),
                # resident params (constant block index -> no re-DMA per step)
                pl.BlockSpec((dp, C), lambda bi, ji: (0, 0)),
                pl.BlockSpec((2, C), lambda bi, ji: (0, 0)),
                pl.BlockSpec((1, C), lambda bi, ji: (0, 0)),
                pl.BlockSpec((1, C), lambda bi, ji: (0, 0)),
            ],
            out_specs=pl.BlockSpec((None, tm, C), lambda bi, ji: (bi, ji, 0)),
        ),
        compiler_params=pltpu.CompilerParams(
            dimension_semantics=("parallel", "parallel"),
            vmem_limit_bytes=32 * 1024 * 1024),
    )(ids2, pos, w_oh, w_bnd, g2, be2)

    return out.reshape(B, K, L, C)


# ----------------------------------------------------------------------------
# Host glue: positional-encoding table, integer id packing (no dense one-hot)
# ----------------------------------------------------------------------------
def make_positional_encoding(d_model, max_len=1 << 13):
    position = jnp.arange(max_len, dtype=jnp.float32)[:, None]
    div_term = jnp.exp(jnp.arange(0, d_model, 2, dtype=jnp.float32)
                       * (-math.log(10000.0) / d_model))
    pe = jnp.zeros((max_len, d_model), dtype=jnp.float32)
    pe = pe.at[:, 0::2].set(jnp.sin(position * div_term))
    pe = pe.at[:, 1::2].set(jnp.cos(position * div_term))
    return pe


def build_ids(seq_ids, msa_ids):
    """Packs [seq | msa column ids (+24*g offsets) | boundary ints] as int32."""
    B, K, R, L = msa_ids.shape
    n_groups = R - 1                                             # seq + (R-2) msa rows
    msa_t = jnp.swapaxes(msa_ids, -2, -1).astype(jnp.int32)      # (B, K, L, R)
    core = msa_t[..., :R - 2]
    bnd = msa_t[..., R - 2:]
    seq_b = jnp.broadcast_to(seq_ids.astype(jnp.int32)[:, None, :, None],
                             (B, K, L, 1))
    groups = jnp.concatenate([seq_b, core], axis=-1)             # (B, K, L, G)
    groups = groups + 24 * jnp.arange(n_groups, dtype=jnp.int32) # pre-add offsets
    return jnp.concatenate([groups, bnd], axis=-1)               # (B, K, L, G+2)


def msa_embeddings_forward(seq_ids, msa_ids, position_ids, params, **kw):
    ids_all = build_ids(seq_ids, msa_ids)
    pos_emb = params["pe"][position_ids]                         # (B, L, C)
    return msa_embeddings_pallas(ids_all, pos_emb,
                                 params["w"], params["b"],
                                 params["gamma"], params["beta"], **kw)
    # TODO(synk): dropout omitted (eval-mode identity)


# pure-JAX reference (dense one-hot path) for sanity checking
def msa_embeddings_ref(seq_ids, msa_ids, position_ids, params, eps=1e-5):
    B, K, R, L = msa_ids.shape
    seq_oh = jax.nn.one_hot(seq_ids, 24, dtype=jnp.float32)
    msa_t = jnp.swapaxes(msa_ids, -2, -1)
    boundary = msa_t[..., -2:].astype(jnp.float32)
    msa_oh = jax.nn.one_hot(msa_t[..., :-2], 24,
                            dtype=jnp.float32).reshape(B, K, L, -1)
    seq_b = jnp.broadcast_to(seq_oh[:, None], (B, K, L, 24))
    x = jnp.concatenate([seq_b, msa_oh, boundary], axis=-1)
    C = params["w"].shape[1]
    h = x @ params["w"] + params["b"]
    e = h * math.sqrt(C) + params["pe"][position_ids][:, None]
    mean = e.mean(-1, keepdims=True)
    var = ((e - mean) ** 2).mean(-1, keepdims=True)
    n = (e - mean) / jnp.sqrt(var + eps)
    return n * params["gamma"] + params["beta"]


# ----------------------------------------------------------------------------
if __name__ == "__main__":
    # small, module-consistent shapes; C = 128 keeps the output block lane-dense
    B, K, L = 2, 3, 16
    msa_gap = 1
    embed_dim = 128
    R = 2 * msa_gap + 3                       # msa_ids rows (last 2 = boundary)
    D_in = (msa_gap * 2 + 2) * 24 + 2         # 98

    key = jax.random.PRNGKey(0)
    k1, k2, k3, k4, k5, k6, k7 = jax.random.split(key, 7)

    seq_ids = jax.random.randint(k1, (B, L), 0, 24, dtype=jnp.int32)
    msa_core = jax.random.randint(k2, (B, K, R - 2, L), 0, 24, dtype=jnp.int32)
    msa_boundary = jax.random.randint(k3, (B, K, 2, L), 0, 2, dtype=jnp.int32)
    msa_ids = jnp.concatenate([msa_core, msa_boundary], axis=2)   # (B, K, R, L)
    position_ids = jnp.broadcast_to(jnp.arange(L, dtype=jnp.int32), (B, L))

    bound = 1.0 / math.sqrt(D_in)
    params = {
        "w": jax.random.uniform(k4, (D_in, embed_dim), jnp.float32, -bound, bound),
        "b": jax.random.uniform(k5, (embed_dim,), jnp.float32, -bound, bound),
        "gamma": 1.0 + 0.1 * jax.random.normal(k6, (embed_dim,), jnp.float32),
        "beta": 0.1 * jax.random.normal(k7, (embed_dim,), jnp.float32),
        "pe": make_positional_encoding(embed_dim),
    }

    ref = msa_embeddings_ref(seq_ids, msa_ids, position_ids, params)

    # exact path (f32 one-hot + f32 weight) -- tight tolerance
    out_f32 = msa_embeddings_forward(seq_ids, msa_ids, position_ids, params,
                                     compute_dtype=jnp.float32)
    out_f32 = jax.block_until_ready(out_f32)
    assert out_f32.shape == (B, K, L, embed_dim)
    assert jnp.allclose(out_f32, ref, atol=1e-3, rtol=1e-3), "f32 mismatch vs reference"

    # fast path (bf16 one-hot + bf16 weight on the MXU) -- relaxed tolerance
    out_bf16 = msa_embeddings_forward(seq_ids, msa_ids, position_ids, params,
                                      compute_dtype=jnp.bfloat16)
    out_bf16 = jax.block_until_ready(out_bf16)
    assert out_bf16.shape == (B, K, L, embed_dim)
    assert jnp.allclose(out_bf16, ref, atol=5e-2, rtol=5e-2), "bf16 mismatch vs reference"

    print("KERNEL_OK")
</pallas_src>

<mosaic_0001>
module attributes {stable_mosaic.version = 11 : i64} {
  func.func @_msa_emb_kernel(%arg0: i32, %arg1: i32, %arg2: memref<1x48x6xi32, #tpu.memory_space<vmem>>, %arg3: memref<1x16x128xf32, #tpu.memory_space<vmem>>, %arg4: memref<128x128xf32, #tpu.memory_space<vmem>>, %arg5: memref<2x128xf32, #tpu.memory_space<vmem>>, %arg6: memref<1x128xf32, #tpu.memory_space<vmem>>, %arg7: memref<1x128xf32, #tpu.memory_space<vmem>>, %arg8: memref<1x48x128xf32, #tpu.memory_space<vmem>>) attributes {dimension_semantics = [#tpu.dimension_semantics<parallel>, #tpu.dimension_semantics<parallel>], iteration_bounds = array<i64: 2, 1>, scalar_prefetch = 0 : i64, scratch_operands = 0 : i64, tpu.core_type = #tpu.core_type<tc>, window_params = [{transform_indices = @transform_0, window_bounds = array<i64: 1, 48, 6>}, {transform_indices = @transform_1, window_bounds = array<i64: 1, 16, 128>}, {pipeline_mode = #tpu.pipeline_mode<synchronous>, transform_indices = @transform_2, window_bounds = array<i64: 128, 128>}, {pipeline_mode = #tpu.pipeline_mode<synchronous>, transform_indices = @transform_3, window_bounds = array<i64: 2, 128>}, {pipeline_mode = #tpu.pipeline_mode<synchronous>, transform_indices = @transform_4, window_bounds = array<i64: 1, 128>}, {pipeline_mode = #tpu.pipeline_mode<synchronous>, transform_indices = @transform_5, window_bounds = array<i64: 1, 128>}, {transform_indices = @transform_6, window_bounds = array<i64: 1, 48, 128>}]} {
    %c0 = arith.constant 0 : index
    %c0_0 = arith.constant 0 : index
    %c0_1 = arith.constant 0 : index
    %0 = vector.load %arg2[%c0, %c0_0, %c0_1] : memref<1x48x6xi32, #tpu.memory_space<vmem>>, vector<1x48x6xi32>
    %1 = vector.shape_cast %0 : vector<1x48x6xi32> to vector<48x6xi32>
    %2 = tpu.iota {dimensions = array<i32: 1>} : vector<1x128xi32>
    %3 = vector.extract_strided_slice %1 {offsets = [0, 0], sizes = [48, 1], strides = [1, 1]} : vector<48x6xi32> to vector<48x1xi32>
    %4 = vector.broadcast %2 : vector<1x128xi32> to vector<48x128xi32>
    %5 = vector.broadcast %3 : vector<48x1xi32> to vector<48x128xi32>
    %6 = arith.cmpi eq, %4, %5 : vector<48x128xi32>
    %7 = vector.extract_strided_slice %1 {offsets = [0, 1], sizes = [48, 1], strides = [1, 1]} : vector<48x6xi32> to vector<48x1xi32>
    %8 = vector.broadcast %2 : vector<1x128xi32> to vector<48x128xi32>
    %9 = vector.broadcast %7 : vector<48x1xi32> to vector<48x128xi32>
    %10 = arith.cmpi eq, %8, %9 : vector<48x128xi32>
    %11 = arith.ori %6, %10 : vector<48x128xi1>
    %12 = vector.extract_strided_slice %1 {offsets = [0, 2], sizes = [48, 1], strides = [1, 1]} : vector<48x6xi32> to vector<48x1xi32>
    %13 = vector.broadcast %2 : vector<1x128xi32> to vector<48x128xi32>
    %14 = vector.broadcast %12 : vector<48x1xi32> to vector<48x128xi32>
    %15 = arith.cmpi eq, %13, %14 : vector<48x128xi32>
    %16 = arith.ori %11, %15 : vector<48x128xi1>
    %17 = vector.extract_strided_slice %1 {offsets = [0, 3], sizes = [48, 1], strides = [1, 1]} : vector<48x6xi32> to vector<48x1xi32>
    %18 = vector.broadcast %2 : vector<1x128xi32> to vector<48x128xi32>
    %19 = vector.broadcast %17 : vector<48x1xi32> to vector<48x128xi32>
    %20 = arith.cmpi eq, %18, %19 : vector<48x128xi32>
    %21 = arith.ori %16, %20 : vector<48x128xi1>
    %cst = arith.constant 1.000000e+00 : f32
    %cst_2 = arith.constant 0.000000e+00 : f32
    %22 = vector.broadcast %cst : f32 to vector<48x128xf32>
    %23 = vector.broadcast %cst_2 : f32 to vector<48x128xf32>
    %24 = arith.select %21, %22, %23 : vector<48x128xi1>, vector<48x128xf32>
    %c0_3 = arith.constant 0 : index
    %c0_4 = arith.constant 0 : index
    %25 = vector.load %arg4[%c0_3, %c0_4] : memref<128x128xf32, #tpu.memory_space<vmem>>, vector<128x128xf32>
    %cst_5 = arith.constant dense<0.000000e+00> : vector<48x128xf32>
    %26 = tpu.matmul %24, %25, %cst_5 {dimension_numbers = #tpu.dot_dimension_numbers<[1], [0], [0], [1], [0, 0, 1, 1], [], []>} : vector<48x128xf32>, vector<128x128xf32>, vector<48x128xf32> -> vector<48x128xf32>
    %c0_6 = arith.constant 0 : index
    %c0_7 = arith.constant 0 : index
    %27 = vector.load %arg5[%c0_6, %c0_7] : memref<2x128xf32, #tpu.memory_space<vmem>>, vector<2x128xf32>
    %28 = vector.extract_strided_slice %1 {offsets = [0, 4], sizes = [48, 1], strides = [1, 1]} : vector<48x6xi32> to vector<48x1xi32>
    %29 = arith.sitofp %28 : vector<48x1xi32> to vector<48x1xf32>
    %30 = vector.extract_strided_slice %1 {offsets = [0, 5], sizes = [48, 1], strides = [1, 1]} : vector<48x6xi32> to vector<48x1xi32>
    %31 = arith.sitofp %30 : vector<48x1xi32> to vector<48x1xf32>
    %32 = vector.extract_strided_slice %27 {offsets = [0, 0], sizes = [1, 128], strides = [1, 1]} : vector<2x128xf32> to vector<1x128xf32>
    %33 = vector.broadcast %29 : vector<48x1xf32> to vector<48x128xf32>
    %34 = vector.broadcast %32 : vector<1x128xf32> to vector<48x128xf32>
    %35 = arith.mulf %33, %34 : vector<48x128xf32>
    %36 = arith.addf %26, %35 : vector<48x128xf32>
    %37 = vector.extract_strided_slice %27 {offsets = [1, 0], sizes = [1, 128], strides = [1, 1]} : vector<2x128xf32> to vector<1x128xf32>
    %38 = vector.broadcast %31 : vector<48x1xf32> to vector<48x128xf32>
    %39 = vector.broadcast %37 : vector<1x128xf32> to vector<48x128xf32>
    %40 = arith.mulf %38, %39 : vector<48x128xf32>
    %41 = arith.addf %36, %40 : vector<48x128xf32>
    %42 = vector.shape_cast %41 : vector<48x128xf32> to vector<3x16x128xf32>
    %cst_8 = arith.constant 11.3137083 : f32
    %43 = vector.broadcast %cst_8 : f32 to vector<3x16x128xf32>
    %44 = arith.mulf %42, %43 : vector<3x16x128xf32>
    %c0_9 = arith.constant 0 : index
    %c0_10 = arith.constant 0 : index
    %c0_11 = arith.constant 0 : index
    %45 = vector.load %arg3[%c0_9, %c0_10, %c0_11] : memref<1x16x128xf32, #tpu.memory_space<vmem>>, vector<1x16x128xf32>
    %46 = vector.shape_cast %45 : vector<1x16x128xf32> to vector<16x128xf32>
    %47 = vector.shape_cast %46 : vector<16x128xf32> to vector<1x16x128xf32>
    %48 = vector.broadcast %47 : vector<1x16x128xf32> to vector<3x16x128xf32>
    %49 = arith.addf %44, %48 : vector<3x16x128xf32>
    %50 = vector.shape_cast %49 : vector<3x16x128xf32> to vector<48x128xf32>
    %cst_12 = arith.constant dense<0.000000e+00> : vector<48xf32>
    %51 = vector.multi_reduction <add>, %50, %cst_12 [1] : vector<48x128xf32> to vector<48xf32>
    %52 = vector.shape_cast %51 : vector<48xf32> to vector<48x1xf32>
    %53 = arith.mulf %50, %50 : vector<48x128xf32>
    %cst_13 = arith.constant dense<0.000000e+00> : vector<48xf32>
    %54 = vector.multi_reduction <add>, %53, %cst_13 [1] : vector<48x128xf32> to vector<48xf32>
    %55 = vector.shape_cast %54 : vector<48xf32> to vector<48x1xf32>
    %cst_14 = arith.constant 7.812500e-03 : f32
    %56 = vector.broadcast %cst_14 : f32 to vector<48x1xf32>
    %57 = arith.mulf %52, %56 : vector<48x1xf32>
    %cst_15 = arith.constant 7.812500e-03 : f32
    %58 = vector.broadcast %cst_15 : f32 to vector<48x1xf32>
    %59 = arith.mulf %55, %58 : vector<48x1xf32>
    %60 = arith.mulf %57, %57 : vector<48x1xf32>
    %61 = arith.subf %59, %60 : vector<48x1xf32>
    %cst_16 = arith.constant 9.99999974E-6 : f32
    %62 = vector.broadcast %cst_16 : f32 to vector<48x1xf32>
    %63 = arith.addf %61, %62 : vector<48x1xf32>
    %64 = math.rsqrt %63 : vector<48x1xf32>
    %65 = vector.broadcast %57 : vector<48x1xf32> to vector<48x128xf32>
    %66 = arith.subf %50, %65 : vector<48x128xf32>
    %67 = vector.broadcast %64 : vector<48x1xf32> to vector<48x128xf32>
    %68 = arith.mulf %66, %67 : vector<48x128xf32>
    %c0_17 = arith.constant 0 : index
    %c0_18 = arith.constant 0 : index
    %69 = vector.load %arg6[%c0_17, %c0_18] : memref<1x128xf32, #tpu.memory_space<vmem>>, vector<1x128xf32>
    %70 = vector.broadcast %69 : vector<1x128xf32> to vector<48x128xf32>
    %71 = arith.mulf %68, %70 : vector<48x128xf32>
    %c0_19 = arith.constant 0 : index
    %c0_20 = arith.constant 0 : index
    %72 = vector.load %arg7[%c0_19, %c0_20] : memref<1x128xf32, #tpu.memory_space<vmem>>, vector<1x128xf32>
    %73 = vector.broadcast %72 : vector<1x128xf32> to vector<48x128xf32>
    %74 = arith.addf %71, %73 : vector<48x128xf32>
    %c0_21 = arith.constant 0 : index
    %c0_22 = arith.constant 0 : index
    %c0_23 = arith.constant 0 : index
    %75 = vector.load %arg8[%c0_21, %c0_22, %c0_23] : memref<1x48x128xf32, #tpu.memory_space<vmem>>, vector<1x48x128xf32>
    %76 = vector.shape_cast %75 : vector<1x48x128xf32> to vector<48x128xf32>
    %77 = vector.shape_cast %74 : vector<48x128xf32> to vector<1x48x128xf32>
    tpu.vector_store %arg8[%c0_21, %c0_22, %c0_23], %77 {strides = array<i32>} : memref<1x48x128xf32, #tpu.memory_space<vmem>>, vector<1x48x128xf32>,
    return
  }
  func.func @transform_0(%arg0: i32, %arg1: i32) -> (i32, i32, i32) {
    %c0_i32 = arith.constant 0 : i32
    %c0_i32_0 = arith.constant 0 : i32
    return %arg0, %arg1, %c0_i32 : i32, i32, i32
  }
  func.func @transform_1(%arg0: i32, %arg1: i32) -> (i32, i32, i32) {
    %c0_i32 = arith.constant 0 : i32
    %c0_i32_0 = arith.constant 0 : i32
    %c0_i32_1 = arith.constant 0 : i32
    return %arg0, %c0_i32, %c0_i32_0 : i32, i32, i32
  }
  func.func @transform_2(%arg0: i32, %arg1: i32) -> (i32, i32) {
    %c0_i32 = arith.constant 0 : i32
    %c0_i32_0 = arith.constant 0 : i32
    %c0_i32_1 = arith.constant 0 : i32
    return %c0_i32, %c0_i32_0 : i32, i32
  }
  func.func @transform_3(%arg0: i32, %arg1: i32) -> (i32, i32) {
    %c0_i32 = arith.constant 0 : i32
    %c0_i32_0 = arith.constant 0 : i32
    %c0_i32_1 = arith.constant 0 : i32
    return %c0_i32, %c0_i32_0 : i32, i32
  }
  func.func @transform_4(%arg0: i32, %arg1: i32) -> (i32, i32) {
    %c0_i32 = arith.constant 0 : i32
    %c0_i32_0 = arith.constant 0 : i32
    %c0_i32_1 = arith.constant 0 : i32
    return %c0_i32, %c0_i32_0 : i32, i32
  }
  func.func @transform_5(%arg0: i32, %arg1: i32) -> (i32, i32) {
    %c0_i32 = arith.constant 0 : i32
    %c0_i32_0 = arith.constant 0 : i32
    %c0_i32_1 = arith.constant 0 : i32
    return %c0_i32, %c0_i32_0 : i32, i32
  }
  func.func @transform_6(%arg0: i32, %arg1: i32) -> (i32, i32, i32) {
    %c0_i32 = arith.constant 0 : i32
    %c0_i32_0 = arith.constant 0 : i32
    return %arg0, %arg1, %c0_i32 : i32, i32, i32
  }
}

</mosaic_0001>

<llo_original>
// kernel: tpu_custom_call.1
$region0: #{tpu_custom_call.1}
  #allocation0 [shape = 'u32[]', space=smem, size = 0x4, offset = 0x4, fixed_abs, tag = 'smem constant byte address 0x4 - core index']
  #allocation1 [shape = 'u32[144,128]{1,0:T(1,128)}', space=vmem, size = 0x12000, scoped, tag = 'internal scratch']
  %s0 = inlined_call_operand.vmem [shape: s32[2,48,6], index: 0, kind: input, shape index: {}]
  %s1 = inlined_call_operand.vmem [shape: f32[2,16,128], index: 1, kind: input, shape index: {}]
  %s2 = inlined_call_operand.hbm [shape: f32[128,128], index: 2, kind: input, shape index: {}]
  %s3 = inlined_call_operand.vmem [shape: f32[2,128], index: 3, kind: input, shape index: {}]
  %s4 = inlined_call_operand.vmem [shape: f32[1,128], index: 4, kind: input, shape index: {}]
  %s5 = inlined_call_operand.vmem [shape: f32[1,128], index: 5, kind: input, shape index: {}]
  %s6 = inlined_call_operand.hbm [shape: f32[2,48,128], index: 6, kind: output, shape index: {}]
  %s7 = sld [smem:[#allocation0]]
  $region61: #{tpu_custom_call.1} parent=0
    _
  %s9 = ssub.s32 1, %s7
  %s10 = scalar_select 0, %s9, %s7
  $region1: #{tpu_custom_call.1} parent=0
    #allocation2 [shape = 'u8[65536]{0}', space=vmem, size = 0x10000, scoped, tag = 'input window, operand 2, single buffered']
    #allocation3 [shape = 's32[2]{0}', space=sflag, size = 0x8, scoped, tag = 'scoped memory for tpu_custom_call.1']
    #allocation4 [shape = 's32[2]{0}', space=sflag, size = 0x8, scoped, tag = 'scoped memory for tpu_custom_call.1']
    #allocation5 [shape = 'u8[49152]{0}', space=vmem, size = 0xc000, scoped, tag = 'output window, operand 0']
    %11 = vsyncpa [#allocation3], 0
    %12 = vsyncpa [#allocation4], 0
    %s13 = scalar_lea.sflag [#allocation4], 1
    %14 = vsyncpa %s13, 0
    loop: start=0, step=1, limit=4
    $region2: #{tpu_custom_call.1} parent=1 // loop_pre_header
      _
    $region3: #{tpu_custom_call.1} parent=1 // loop_header
      %s16 = sphi 0, %s20
      %p17 = scmp.ge.s32.totalorder %s16, 4
      %s23 = sphi 0, %s35
      %s24 = sphi 0, %s31
      %s25 = sphi 0, %s23
      %s26 = sphi 0, %s24
      %s27 = sphi 0, %s25
      %s28 = sphi 0, %s26
      %s40 = sphi 0, %s42
      %s43 = sphi 0, %s40
      %s44 = sphi 0, %s43
      %s60 = sphi 0, %s44
      %s66 = sphi 0, %s68
      %s69 = sphi 0, %s66
      %s70 = sphi 0, %s69
      %s86 = sphi 0, %s70
      %s90 = sphi 0, %s90
      %s92 = sphi 0, %s90
      %s93 = sphi 0, %s92
      %s107 = sphi 0, %s93
      %s111 = sphi 0, %s111
      %s113 = sphi 0, %s111
      %s114 = sphi 0, %s113
      %s128 = sphi 0, %s114
      %s132 = sphi 0, %s132
      %s134 = sphi 0, %s132
      %s135 = sphi 0, %s134
      %s149 = sphi 0, %s135
      %s153 = sphi 0, %s153
      %s155 = sphi 0, %s153
      %s156 = sphi 0, %s155
      %s170 = sphi 0, %s156
      %s178 = sphi 0, %s180
      %s181 = sphi 0, %s178
      %s182 = sphi 0, %s181
      %s198 = sphi 0, %s182
    $region4: #{tpu_custom_call.1} parent=1 // loop_header_branch
      %19 = sbr.rel (%p17) target = $region8
    $region5: #{tpu_custom_call.1} parent=1 // loop_body
      %s21 = ssub.s32 %s16, 1
      %s22 = ssub.s32 %s16, 2
      %s29 = sadd.s32 1, %s24
      %p30 = scmp.ge.s32.totalorder %s29, 1
      %s31 = scalar_select %p30, 0, %s29
      %s32 = sadd.s32 1, %s23
      %s33 = scalar_select %p30, %s32, %s23
      %p34 = scmp.ge.s32.totalorder %s33, 2
      %s35 = scalar_select %p34, 0, %s33
      %s36 = ssub.s32 %s23, %s35
      %s37 = ssub.s32 %s24, %s31
      %s38 = sor.u32 %s36, %s37
      %p39 = scmp.eq.s32.totalorder %s38, 0
      %s41 = sadd.s32 %s40, 1
      %s42 = scalar_select %p39, %s40, %s41
      %p45 = pneg %p39
      %p46 = scmp.eq.s32.totalorder %s16, 1
      %p47 = por %p45, %p46
      %p48 = scmp.ne.s32.totalorder %s40, %s43
      %p49 = scmp.eq.s32.totalorder %s16, 0
      %p50 = por %p48, %p49
      %p51 = scmp.ne.s32.totalorder %s40, %s43
      %p52 = scmp.eq.s32.totalorder %s21, 1
      %p53 = por %p51, %p52
      %p54 = scmp.ne.s32.totalorder %s43, %s44
      %p55 = scmp.eq.s32.totalorder %s21, 0
      %p56 = por %p54, %p55
      %p57 = scmp.ne.s32.totalorder %s43, %s44
      %p58 = scmp.eq.s32.totalorder %s22, 1
      %p59 = por %p57, %p58
      %p61 = scmp.ne.s32.totalorder %s44, %s60
      %p62 = scmp.eq.s32.totalorder %s22, 0
      %p63 = por %p61, %p62
      %s64 = ssub.s32 %s23, %s35
      %p65 = scmp.eq.s32.totalorder %s64, 0
      %s67 = sadd.s32 %s66, 1
      %s68 = scalar_select %p65, %s66, %s67
      %p71 = pneg %p65
      %p72 = scmp.eq.s32.totalorder %s16, 1
      %p73 = por %p71, %p72
      %p74 = scmp.ne.s32.totalorder %s66, %s69
      %p75 = scmp.eq.s32.totalorder %s16, 0
      %p76 = por %p74, %p75
      %p77 = scmp.ne.s32.totalorder %s66, %s69
      %p78 = scmp.eq.s32.totalorder %s21, 1
      %p79 = por %p77, %p78
      %p80 = scmp.ne.s32.totalorder %s69, %s70
      %p81 = scmp.eq.s32.totalorder %s21, 0
      %p82 = por %p80, %p81
      %p83 = scmp.ne.s32.totalorder %s69, %s70
      %p84 = scmp.eq.s32.totalorder %s22, 1
      %p85 = por %p83, %p84
      %p87 = scmp.ne.s32.totalorder %s70, %s86
      %p88 = scmp.eq.s32.totalorder %s22, 0
      %p89 = por %p87, %p88
      %s91 = sadd.s32 %s90, 1
      %p94 = scmp.eq.s32.totalorder %s16, 1
      %p95 = scmp.ne.s32.totalorder %s90, %s92
      %p96 = scmp.eq.s32.totalorder %s16, 0
      %p97 = por %p95, %p96
      %p98 = scmp.ne.s32.totalorder %s90, %s92
      %p99 = scmp.eq.s32.totalorder %s21, 1
      %p100 = por %p98, %p99
      %p101 = scmp.ne.s32.totalorder %s92, %s93
      %p102 = scmp.eq.s32.totalorder %s21, 0
      %p103 = por %p101, %p102
      %p104 = scmp.ne.s32.totalorder %s92, %s93
      %p105 = scmp.eq.s32.totalorder %s22, 1
      %p106 = por %p104, %p105
      %p108 = scmp.ne.s32.totalorder %s93, %s107
      %p109 = scmp.eq.s32.totalorder %s22, 0
      %p110 = por %p108, %p109
      %s112 = sadd.s32 %s111, 1
      %p115 = scmp.eq.s32.totalorder %s16, 1
      %p116 = scmp.ne.s32.totalorder %s111, %s113
      %p117 = scmp.eq.s32.totalorder %s16, 0
      %p118 = por %p116, %p117
      %p119 = scmp.ne.s32.totalorder %s111, %s113
      %p120 = scmp.eq.s32.totalorder %s21, 1
      %p121 = por %p119, %p120
      %p122 = scmp.ne.s32.totalorder %s113, %s114
      %p123 = scmp.eq.s32.totalorder %s21, 0
      %p124 = por %p122, %p123
      %p125 = scmp.ne.s32.totalorder %s113, %s114
      %p126 = scmp.eq.s32.totalorder %s22, 1
      %p127 = por %p125, %p126
      %p129 = scmp.ne.s32.totalorder %s114, %s128
      %p130 = scmp.eq.s32.totalorder %s22, 0
      %p131 = por %p129, %p130
      %s133 = sadd.s32 %s132, 1
      %p136 = scmp.eq.s32.totalorder %s16, 1
      %p137 = scmp.ne.s32.totalorder %s132, %s134
      %p138 = scmp.eq.s32.totalorder %s16, 0
      %p139 = por %p137, %p138
      %p140 = scmp.ne.s32.totalorder %s132, %s134
      %p141 = scmp.eq.s32.totalorder %s21, 1
      %p142 = por %p140, %p141
      %p143 = scmp.ne.s32.totalorder %s134, %s135
      %p144 = scmp.eq.s32.totalorder %s21, 0
      %p145 = por %p143, %p144
      %p146 = scmp.ne.s32.totalorder %s134, %s135
      %p147 = scmp.eq.s32.totalorder %s22, 1
      %p148 = por %p146, %p147
      %p150 = scmp.ne.s32.totalorder %s135, %s149
      %p151 = scmp.eq.s32.totalorder %s22, 0
      %p152 = por %p150, %p151
      %s154 = sadd.s32 %s153, 1
      %p157 = scmp.eq.s32.totalorder %s16, 1
      %p158 = scmp.ne.s32.totalorder %s153, %s155
      %p159 = scmp.eq.s32.totalorder %s16, 0
      %p160 = por %p158, %p159
      %p161 = scmp.ne.s32.totalorder %s153, %s155
      %p162 = scmp.eq.s32.totalorder %s21, 1
      %p163 = por %p161, %p162
      %p164 = scmp.ne.s32.totalorder %s155, %s156
      %p165 = scmp.eq.s32.totalorder %s21, 0
      %p166 = por %p164, %p165
      %p167 = scmp.ne.s32.totalorder %s155, %s156
      %p168 = scmp.eq.s32.totalorder %s22, 1
      %p169 = por %p167, %p168
      %p171 = scmp.ne.s32.totalorder %s156, %s170
      %p172 = scmp.eq.s32.totalorder %s22, 0
      %p173 = por %p171, %p172
      %s174 = ssub.s32 %s23, %s35
      %s175 = ssub.s32 %s24, %s31
      %s176 = sor.u32 %s174, %s175
      %p177 = scmp.eq.s32.totalorder %s176, 0
      %s179 = sadd.s32 %s178, 1
      %s180 = scalar_select %p177, %s178, %s179
      %p183 = pneg %p177
      %p184 = scmp.eq.s32.totalorder %s16, 1
      %p185 = por %p183, %p184
      %p186 = scmp.ne.s32.totalorder %s178, %s181
      %p187 = scmp.eq.s32.totalorder %s16, 0
      %p188 = por %p186, %p187
      %p189 = scmp.ne.s32.totalorder %s178, %s181
      %p190 = scmp.eq.s32.totalorder %s21, 1
      %p191 = por %p189, %p190
      %p192 = scmp.ne.s32.totalorder %s181, %s182
      %p193 = scmp.eq.s32.totalorder %s21, 0
      %p194 = por %p192, %p193
      %p195 = scmp.ne.s32.totalorder %s181, %s182
      %p196 = scmp.eq.s32.totalorder %s22, 1
      %p197 = por %p195, %p196
      %p199 = scmp.ne.s32.totalorder %s182, %s198
      %p200 = scmp.eq.s32.totalorder %s22, 0
      %p201 = por %p199, %p200
      %p202 = scmp.le.s32.totalorder 1, %s16
      %p203 = scmp.lt.s32.totalorder %s16, 3
      %p204 = pnand %p202, %p203
      %p205 = pneg %p204
      // Predicated region
      $region9: #{tpu_custom_call.1} parent=5 // pred_check
        _
      $region10: #{tpu_custom_call.1} parent=5 // pred_check_branch
        %207 = sbr.rel (%p204) target = $region12
      $region11: #{tpu_custom_call.1} parent=5 // pred_region
        %s208 = ssub.s32 %s16, 1
        // Predicated region
        $region13: #{tpu_custom_call.1} parent=11 // pred_check
          %p209 = pneg %p103
        $region14: #{tpu_custom_call.1} parent=11 // pred_check_branch
          %211 = sbr.rel (%p209) target = $region16
        $region15: #{tpu_custom_call.1} parent=11 // pred_region
          %s213 = ssub.s32 2048, 2048
          %214 = vsyncadd [#allocation3], %s213
          %s215 = sshll.u32 [#allocation2], 4
          %s216 = int_to_ptr.vmem [resolvable:$true] %s215
          %221 = dma.hbm_to_vmem [thread:$0]  %s2, 2048, %s216, [#allocation3], 128, 128, 8
        $region16: #{tpu_custom_call.1} parent=11 // pred_fallthru
          _
        // Predicated region
        $region17: #{tpu_custom_call.1} parent=11 // pred_check
          %p222 = pneg %p124
        $region18: #{tpu_custom_call.1} parent=11 // pred_check_branch
          %224 = sbr.rel (%p222) target = $region20
        $region19: #{tpu_custom_call.1} parent=11 // pred_region
          _
        $region20: #{tpu_custom_call.1} parent=11 // pred_fallthru
          _
        // Predicated region
        $region21: #{tpu_custom_call.1} parent=11 // pred_check
          %p225 = pneg %p145
        $region22: #{tpu_custom_call.1} parent=11 // pred_check_branch
          %227 = sbr.rel (%p225) target = $region24
        $region23: #{tpu_custom_call.1} parent=11 // pred_region
          _
        $region24: #{tpu_custom_call.1} parent=11 // pred_fallthru
          _
        // Predicated region
        $region25: #{tpu_custom_call.1} parent=11 // pred_check
          %p228 = pneg %p166
        $region26: #{tpu_custom_call.1} parent=11 // pred_check_branch
          %230 = sbr.rel (%p228) target = $region28
        $region27: #{tpu_custom_call.1} parent=11 // pred_region
          _
        $region28: #{tpu_custom_call.1} parent=11 // pred_fallthru
          _
      $region12: #{tpu_custom_call.1} parent=5 // pred_fallthru
        _
      %p231 = scmp.lt.s32.totalorder %s16, 2
      // Predicated region
      $region29: #{tpu_custom_call.1} parent=5 // pred_check
        %p232 = pneg %p231
      $region30: #{tpu_custom_call.1} parent=5 // pred_check_branch
        %234 = sbr.rel (%p232) target = $region32
      $region31: #{tpu_custom_call.1} parent=5 // pred_region
        // Predicated region
        $region33: #{tpu_custom_call.1} parent=31 // pred_check
          %p235 = pneg %p50
        $region34: #{tpu_custom_call.1} parent=31 // pred_check_branch
          %237 = sbr.rel (%p235) target = $region36
        $region35: #{tpu_custom_call.1} parent=31 // pred_region
          %s238 = smul.u32 6, %s24
          %p239 = scmp.lt.s32.totalorder %s23, 1
          %s240 = scalar_select %p239, %s23, 1
          %p241 = scmp.lt.s32.totalorder %s238, 5
          %s242 = scalar_select %p241, %s238, 5
          %s243 = smul.addr %s240, 6
          %s244 = sadd.s32 %s242, %s243
          %s245 = smul.addr %s244, 8
          %s246 = scalar_lea.vmem %s0, %s245
          %s247 = smul.u32 6, %s24
        $region36: #{tpu_custom_call.1} parent=31 // pred_fallthru
          _
        // Predicated region
        $region37: #{tpu_custom_call.1} parent=31 // pred_check
          %p248 = pneg %p76
        $region38: #{tpu_custom_call.1} parent=31 // pred_check_branch
          %250 = sbr.rel (%p248) target = $region40
        $region39: #{tpu_custom_call.1} parent=31 // pred_region
          %p251 = scmp.lt.s32.totalorder %s23, 1
          %s252 = scalar_select %p251, %s23, 1
          %s253 = smul.addr %s252, 2
          %s254 = smul.addr %s253, 8
          %s255 = scalar_lea.vmem %s1, %s254
        $region40: #{tpu_custom_call.1} parent=31 // pred_fallthru
          _
      $region32: #{tpu_custom_call.1} parent=5 // pred_fallthru
        _
      %p256 = scmp.le.s32.totalorder 1, %s16
      %p257 = scmp.lt.s32.totalorder %s16, 3
      %p258 = pnand %p256, %p257
      %p259 = pneg %p258
      // Predicated region
      $region41: #{tpu_custom_call.1} parent=5 // pred_check
        _
      $region42: #{tpu_custom_call.1} parent=5 // pred_check_branch
        %261 = sbr.rel (%p258) target = $region44
      $region43: #{tpu_custom_call.1} parent=5 // pred_region
        %s262 = ssub.s32 %s16, 1
        // Predicated region
        $region45: #{tpu_custom_call.1} parent=43 // pred_check
          %p263 = pneg %p103
        $region46: #{tpu_custom_call.1} parent=43 // pred_check_branch
          %265 = sbr.rel (%p263) target = $region48
        $region47: #{tpu_custom_call.1} parent=43 // pred_region
          %266 = dma.done [#allocation3], 2048
        $region48: #{tpu_custom_call.1} parent=43 // pred_fallthru
          _
        %s267 = smul.u32 6, %s26
        %p268 = scmp.lt.s32.totalorder %s25, 1
        %s269 = scalar_select %p268, %s25, 1
        %p270 = scmp.lt.s32.totalorder %s267, 5
        %s271 = scalar_select %p270, %s267, 5
        %s272 = smul.addr %s269, 6
        %s273 = sadd.s32 %s271, %s272
        %s274 = smul.addr %s273, 8
        %s275 = scalar_lea.vmem %s0, %s274
        %p276 = pneg %p56
        %p277 = pneg %p53
        %p278 = scmp.lt.s32.totalorder %s25, 1
        %s279 = scalar_select %p278, %s25, 1
        %s280 = smul.addr %s279, 2
        %s281 = smul.addr %s280, 8
        %s282 = scalar_lea.vmem %s1, %s281
        %p283 = pneg %p82
        %p284 = pneg %p79
        %p285 = pneg %p103
        %p286 = pneg %p100
        %p287 = pneg %p124
        %p288 = pneg %p121
        %p289 = pneg %p145
        %p290 = pneg %p142
        %p291 = pneg %p166
        %p292 = pneg %p163
        %p293 = pneg %p194
        %p294 = pneg %p191
        %s295 = sand.u32 %s181, 1
        %s296 = scalar_lea.sflag [#allocation4], %s295
        %s297 = sand.u32 %s181, 1
        %s298 = smul.addr %s297, 48
        %s299 = scalar_lea.vmem [#allocation5], %s298
        %s300 = smul.u32 6, %s26
        %p301 = scmp.lt.s32.totalorder %s25, 1
        %s302 = scalar_select %p301, %s25, 1
        %p303 = scmp.lt.s32.totalorder %s300, 5
        %s304 = scalar_select %p303, %s300, 5
        %s305 = smul.addr %s302, 6
        %s306 = sadd.s32 %s304, %s305
        %s307 = smul.addr %s306, 8
        %s308 = scalar_lea.vmem %s0, %s307
        %s309 = smul.u32 6, %s26
        %p310 = scmp.lt.s32.totalorder %s25, 1
        %s311 = scalar_select %p310, %s25, 1
        %s312 = smul.addr %s311, 2
        %s313 = smul.addr %s312, 8
        %s314 = scalar_lea.vmem %s1, %s313
        %s315 = smul.u32 6, %s26
        %v316 = vld [vmem:[%s308] sm:$0xff]
        %v317 = vld [vmem:[%s308 + $0x8] sm:$0xff]
        %v318 = vld [vmem:[%s308 + $0x10] sm:$0xff]
        %v319 = vld [vmem:[%s308 + $0x18] sm:$0xff]
        %v320 = vld [vmem:[%s308 + $0x20] sm:$0xff]
        %v321 = vld [vmem:[%s308 + $0x28] sm:$0xff]
        %v322 = vlaneseq
        %v323 = vand.u32 %v322, 127
        %324 = vset.pattern.permute.xlu0 0
        %325 = vperm.xlu0 %324, %v316
        %v326 = vpop.permute.xlu0 %325
        %327 = vset.pattern.permute.xlu0 0
        %328 = vperm.xlu0 %327, %v317
        %v329 = vpop.permute.xlu0 %328
        %330 = vset.pattern.permute.xlu0 0
        %331 = vperm.xlu0 %330, %v318
        %v332 = vpop.permute.xlu0 %331
        %333 = vset.pattern.permute.xlu0 0
        %334 = vperm.xlu0 %333, %v319
        %v335 = vpop.permute.xlu0 %334
        %336 = vset.pattern.permute.xlu0 0
        %337 = vperm.xlu0 %336, %v320
        %v338 = vpop.permute.xlu0 %337
        %339 = vset.pattern.permute.xlu0 0
        %340 = vperm.xlu0 %339, %v321
        %v341 = vpop.permute.xlu0 %340
        %vm342 = vcmp.eq.s32.totalorder %v323, %v326
        %vm343 = vcmp.eq.s32.totalorder %v323, %v329
        %vm344 = vcmp.eq.s32.totalorder %v323, %v332
        %vm345 = vcmp.eq.s32.totalorder %v323, %v335
        %vm346 = vcmp.eq.s32.totalorder %v323, %v338
        %vm347 = vcmp.eq.s32.totalorder %v323, %v341
        %348 = vset.pattern.permute.xlu0 1
        %349 = vperm.xlu0 %348, %v316
        %v350 = vpop.permute.xlu0 %349
        %351 = vset.pattern.permute.xlu0 1
        %352 = vperm.xlu0 %351, %v317
        %v353 = vpop.permute.xlu0 %352
        %354 = vset.pattern.permute.xlu0 1
        %355 = vperm.xlu0 %354, %v318
        %v356 = vpop.permute.xlu0 %355
        %357 = vset.pattern.permute.xlu0 1
        %358 = vperm.xlu0 %357, %v319
        %v359 = vpop.permute.xlu0 %358
        %360 = vset.pattern.permute.xlu0 1
        %361 = vperm.xlu0 %360, %v320
        %v362 = vpop.permute.xlu0 %361
        %363 = vset.pattern.permute.xlu0 1
        %364 = vperm.xlu0 %363, %v321
        %v365 = vpop.permute.xlu0 %364
        %vm366 = vcmp.eq.s32.totalorder %v323, %v350
        %vm367 = vcmp.eq.s32.totalorder %v323, %v353
        %vm368 = vcmp.eq.s32.totalorder %v323, %v356
        %vm369 = vcmp.eq.s32.totalorder %v323, %v359
        %vm370 = vcmp.eq.s32.totalorder %v323, %v362
        %vm371 = vcmp.eq.s32.totalorder %v323, %v365
        %vm372 = vmor %vm342, %vm366
        %vm373 = vmor %vm343, %vm367
        %vm374 = vmor %vm344, %vm368
        %vm375 = vmor %vm345, %vm369
        %vm376 = vmor %vm346, %vm370
        %vm377 = vmor %vm347, %vm371
        %378 = vset.pattern.permute.xlu0 2
        %379 = vperm.xlu0 %378, %v316
        %v380 = vpop.permute.xlu0 %379
        %381 = vset.pattern.permute.xlu0 2
        %382 = vperm.xlu0 %381, %v317
        %v383 = vpop.permute.xlu0 %382
        %384 = vset.pattern.permute.xlu0 2
        %385 = vperm.xlu0 %384, %v318
        %v386 = vpop.permute.xlu0 %385
        %387 = vset.pattern.permute.xlu0 2
        %388 = vperm.xlu0 %387, %v319
        %v389 = vpop.permute.xlu0 %388
        %390 = vset.pattern.permute.xlu0 2
        %391 = vperm.xlu0 %390, %v320
        %v392 = vpop.permute.xlu0 %391
        %393 = vset.pattern.permute.xlu0 2
        %394 = vperm.xlu0 %393, %v321
        %v395 = vpop.permute.xlu0 %394
        %vm396 = vcmp.eq.s32.totalorder %v323, %v380
        %vm397 = vcmp.eq.s32.totalorder %v323, %v383
        %vm398 = vcmp.eq.s32.totalorder %v323, %v386
        %vm399 = vcmp.eq.s32.totalorder %v323, %v389
        %vm400 = vcmp.eq.s32.totalorder %v323, %v392
        %vm401 = vcmp.eq.s32.totalorder %v323, %v395
        %vm402 = vmor %vm372, %vm396
        %vm403 = vmor %vm373, %vm397
        %vm404 = vmor %vm374, %vm398
        %vm405 = vmor %vm375, %vm399
        %vm406 = vmor %vm376, %vm400
        %vm407 = vmor %vm377, %vm401
        %408 = vset.pattern.permute.xlu0 3
        %409 = vperm.xlu0 %408, %v316
        %v410 = vpop.permute.xlu0 %409
        %411 = vset.pattern.permute.xlu0 3
        %412 = vperm.xlu0 %411, %v317
        %v413 = vpop.permute.xlu0 %412
        %414 = vset.pattern.permute.xlu0 3
        %415 = vperm.xlu0 %414, %v318
        %v416 = vpop.permute.xlu0 %415
        %417 = vset.pattern.permute.xlu0 3
        %418 = vperm.xlu0 %417, %v319
        %v419 = vpop.permute.xlu0 %418
        %420 = vset.pattern.permute.xlu0 3
        %421 = vperm.xlu0 %420, %v320
        %v422 = vpop.permute.xlu0 %421
        %423 = vset.pattern.permute.xlu0 3
        %424 = vperm.xlu0 %423, %v321
        %v425 = vpop.permute.xlu0 %424
        %vm426 = vcmp.eq.s32.totalorder %v323, %v410
        %vm427 = vcmp.eq.s32.totalorder %v323, %v413
        %vm428 = vcmp.eq.s32.totalorder %v323, %v416
        %vm429 = vcmp.eq.s32.totalorder %v323, %v419
        %vm430 = vcmp.eq.s32.totalorder %v323, %v422
        %vm431 = vcmp.eq.s32.totalorder %v323, %v425
        %vm432 = vmor %vm402, %vm426
        %vm433 = vmor %vm403, %vm427
        %vm434 = vmor %vm404, %vm428
        %vm435 = vmor %vm405, %vm429
        %vm436 = vmor %vm406, %vm430
        %vm437 = vmor %vm407, %vm431
        %v438 = vsel %vm432, 1.0, 0.0
        %v439 = vsel %vm433, 1.0, 0.0
        %v440 = vsel %vm434, 1.0, 0.0
        %v441 = vsel %vm435, 1.0, 0.0
        %v442 = vsel %vm436, 1.0, 0.0
        %v443 = vsel %vm437, 1.0, 0.0
        %v444 = vld [vmem:[#allocation2] sm:$0xff]
        %v445 = vld [vmem:[#allocation2 + $0x8] sm:$0xff]
        %v446 = vld [vmem:[#allocation2 + $0x10] sm:$0xff]
        %v447 = vld [vmem:[#allocation2 + $0x18] sm:$0xff]
        %v448 = vld [vmem:[#allocation2 + $0x20] sm:$0xff]
        %v449 = vld [vmem:[#allocation2 + $0x28] sm:$0xff]
        %v450 = vld [vmem:[#allocation2 + $0x30] sm:$0xff]
        %v451 = vld [vmem:[#allocation2 + $0x38] sm:$0xff]
        %v452 = vld [vmem:[#allocation2 + $0x40] sm:$0xff]
        %v453 = vld [vmem:[#allocation2 + $0x48] sm:$0xff]
        %v454 = vld [vmem:[#allocation2 + $0x50] sm:$0xff]
        %v455 = vld [vmem:[#allocation2 + $0x58] sm:$0xff]
        %v456 = vld [vmem:[#allocation2 + $0x60] sm:$0xff]
        %v457 = vld [vmem:[#allocation2 + $0x68] sm:$0xff]
        %v458 = vld [vmem:[#allocation2 + $0x70] sm:$0xff]
        %v459 = vld [vmem:[#allocation2 + $0x78] sm:$0xff]
        %v460 = vld [vmem:[%s3] sm:$0x3]
        %v461 = vcvt.s32.f32 %v316
        %v462 = vcvt.s32.f32 %v317
        %v463 = vcvt.s32.f32 %v318
        %v464 = vcvt.s32.f32 %v319
        %v465 = vcvt.s32.f32 %v320
        %v466 = vcvt.s32.f32 %v321
        %468 = vset.pattern.permute.xlu0 4
        %469 = vperm.xlu0 %468, %v461
        %v470 = vpop.permute.xlu0 %469
        %473 = vset.pattern.permute.xlu0 4
        %474 = vperm.xlu0 %473, %v462
        %v475 = vpop.permute.xlu0 %474
        %478 = vset.pattern.permute.xlu0 4
        %479 = vperm.xlu0 %478, %v463
        %v480 = vpop.permute.xlu0 %479
        %483 = vset.pattern.permute.xlu0 4
        %484 = vperm.xlu0 %483, %v464
        %v485 = vpop.permute.xlu0 %484
        %488 = vset.pattern.permute.xlu0 4
        %489 = vperm.xlu0 %488, %v465
        %v490 = vpop.permute.xlu0 %489
        %493 = vset.pattern.permute.xlu0 4
        %494 = vperm.xlu0 %493, %v466
        %v495 = vpop.permute.xlu0 %494
        %v497 = vlaneseq
        %v498 = vshrl.u32 %v497, 7
        %v499 = vsub.s32 0, %v498
        %v500 = vrot.slane %v460, %v499
        %v501 = vmul.f32 %v470, %v500
        %v502 = vmul.f32 %v475, %v500
        %v503 = vmul.f32 %v480, %v500
        %v504 = vmul.f32 %v485, %v500
        %v505 = vmul.f32 %v490, %v500
        %v506 = vmul.f32 %v495, %v500
        %507 = vmatprep.subr.mxu0 0.0
        %508 = vmatpush1.msra.mxu0 %v444
        %509 = vmatprep.subr.mxu0 0.0
        %510 = vmatpush1.msra.mxu0 %v445
        %511 = vmatprep.subr.mxu0 0.0
        %512 = vmatpush1.msra.mxu0 %v446
        %513 = vmatprep.subr.mxu0 0.0
        %514 = vmatpush1.msra.mxu0 %v447
        %515 = vmatprep.subr.mxu0 0.0
        %516 = vmatpush1.msra.mxu0 %v448
        %517 = vmatprep.subr.mxu0 0.0
        %518 = vmatpush1.msra.mxu0 %v449
        %519 = vmatprep.subr.mxu0 0.0
        %520 = vmatpush1.msra.mxu0 %v450
        %521 = vmatprep.subr.mxu0 0.0
        %522 = vmatpush1.msra.mxu0 %v451
        %523 = vmatprep.subr.mxu0 0.0
        %524 = vmatpush1.msra.mxu0 %v452
        %525 = vmatprep.subr.mxu0 0.0
        %526 = vmatpush1.msra.mxu0 %v453
        %527 = vmatprep.subr.mxu0 0.0
        %528 = vmatpush1.msra.mxu0 %v454
        %529 = vmatprep.subr.mxu0 0.0
        %530 = vmatpush1.msra.mxu0 %v455
        %531 = vmatprep.subr.mxu0 0.0
        %532 = vmatpush1.msra.mxu0 %v456
        %533 = vmatprep.subr.mxu0 0.0
        %534 = vmatpush1.msra.mxu0 %v457
        %535 = vmatprep.subr.mxu0 0.0
        %536 = vmatpush1.msra.mxu0 %v458
        %537 = vmatprep.subr.mxu0 0.0
        %538 = vmatpush1.msra.mxu0 %v459
        %539 = vmatprep.subr.mxu0 0.0
        %540 = vmatpush1.msra.mxu0 0.0
        %541 = vmatprep.subr.mxu0 0.0
        %542 = vmatpush1.msra.mxu0 0.0
        %543 = vmatprep.subr.mxu0 0.0
        %544 = vmatpush1.msra.mxu0 0.0
        %545 = vmatprep.subr.mxu0 0.0
        %546 = vmatpush1.msra.mxu0 0.0
        %547 = vmatprep.subr.mxu0 0.0
        %548 = vmatpush1.msra.mxu0 0.0
        %549 = vmatprep.subr.mxu0 0.0
        %550 = vmatpush1.msra.mxu0 0.0
        %551 = vmatprep.subr.mxu0 0.0
        %552 = vmatpush1.msra.mxu0 0.0
        %553 = vmatprep.subr.mxu0 0.0
        %554 = vmatpush1.msra.mxu0 0.0
        %555 = vmatprep.subr.mxu0 0.0
        %556 = vmatpush1.msra.mxu0 0.0
        %557 = vmatprep.subr.mxu0 0.0
        %558 = vmatpush1.msra.mxu0 0.0
        %559 = vmatprep.subr.mxu0 0.0
        %560 = vmatpush1.msra.mxu0 0.0
        %561 = vmatprep.subr.mxu0 0.0
        %562 = vmatpush1.msra.mxu0 0.0
        %563 = vmatprep.subr.mxu0 0.0
        %564 = vmatpush1.msra.mxu0 0.0
        %565 = vmatprep.subr.mxu0 0.0
        %566 = vmatpush1.msra.mxu0 0.0
        %567 = vmatprep.subr.mxu0 0.0
        %568 = vmatpush1.msra.mxu0 0.0
        %569 = vmatprep.subr.mxu0 0.0
        %570 = vmatpush1.msra.mxu0 0.0
        %571 = vmatprep.mubr.f32.mxu0 0.0
        %572 = vmatmul.mubr.f32.gmra.mrb[0].mxu0 %v438
        %v573 = vpop.f32.mrb[0].mxu0
        %v574 = vadd.f32 %v501, %v573
        %v575 = vpop.f32.mrb[0].mxu0
        %576 = vmatprep.mubr.f32.mxu0 0.0
        %577 = vmatmul.mubr.f32.gmra.mrb[0].mxu0 %v439
        %v578 = vpop.f32.mrb[0].mxu0
        %v579 = vadd.f32 %v502, %v578
        %v580 = vpop.f32.mrb[0].mxu0
        %581 = vmatprep.mubr.f32.mxu0 0.0
        %582 = vmatmul.mubr.f32.gmra.mrb[0].mxu0 %v440
        %v583 = vpop.f32.mrb[0].mxu0
        %v584 = vadd.f32 %v503, %v583
        %v585 = vpop.f32.mrb[0].mxu0
        %586 = vmatprep.mubr.f32.mxu0 0.0
        %587 = vmatmul.mubr.f32.gmra.mrb[0].mxu0 %v441
        %v588 = vpop.f32.mrb[0].mxu0
        %v589 = vadd.f32 %v504, %v588
        %v590 = vpop.f32.mrb[0].mxu0
        %591 = vmatprep.mubr.f32.mxu0 0.0
        %592 = vmatmul.mubr.f32.gmra.mrb[0].mxu0 %v442
        %v593 = vpop.f32.mrb[0].mxu0
        %v594 = vadd.f32 %v505, %v593
        %v595 = vpop.f32.mrb[0].mxu0
        %596 = vmatprep.mubr.f32.mxu0 0.0
        %597 = vmatmul.mubr.f32.gmra.mrb[0].mxu0 %v443
        %v598 = vpop.f32.mrb[0].mxu0
        %v599 = vadd.f32 %v506, %v598
        %v600 = vpop.f32.mrb[0].mxu0
        %601 = vdwg.mxu0
        %602 = vset.pattern.permute.xlu0 5
        %603 = vperm.xlu0 %602, %v461
        %v604 = vpop.permute.xlu0 %603
        %606 = vset.pattern.permute.xlu0 5
        %607 = vperm.xlu0 %606, %v462
        %v608 = vpop.permute.xlu0 %607
        %610 = vset.pattern.permute.xlu0 5
        %611 = vperm.xlu0 %610, %v463
        %v612 = vpop.permute.xlu0 %611
        %614 = vset.pattern.permute.xlu0 5
        %615 = vperm.xlu0 %614, %v464
        %v616 = vpop.permute.xlu0 %615
        %618 = vset.pattern.permute.xlu0 5
        %619 = vperm.xlu0 %618, %v465
        %v620 = vpop.permute.xlu0 %619
        %622 = vset.pattern.permute.xlu0 5
        %623 = vperm.xlu0 %622, %v466
        %v624 = vpop.permute.xlu0 %623
        %v626 = vlaneseq
        %v627 = vshrl.u32 %v626, 7
        %v628 = vsub.s32 1, %v627
        %v629 = vrot.slane %v460, %v628
        %v630 = vmul.f32 %v604, %v629
        %v631 = vmul.f32 %v608, %v629
        %v632 = vmul.f32 %v612, %v629
        %v633 = vmul.f32 %v616, %v629
        %v634 = vmul.f32 %v620, %v629
        %v635 = vmul.f32 %v624, %v629
        %v636 = vadd.f32 %v574, %v630
        %v637 = vadd.f32 %v579, %v631
        %v638 = vadd.f32 %v584, %v632
        %v639 = vadd.f32 %v589, %v633
        %v640 = vadd.f32 %v594, %v634
        %v641 = vadd.f32 %v599, %v635
        %v642 = vmul.f32 %v636, 11.313708
        %v643 = vmul.f32 %v637, 11.313708
        %v644 = vmul.f32 %v638, 11.313708
        %v645 = vmul.f32 %v639, 11.313708
        %v646 = vmul.f32 %v640, 11.313708
        %v647 = vmul.f32 %v641, 11.313708
        %v648 = vld [vmem:[%s314] sm:$0xff]
        %v649 = vld [vmem:[%s314 + $0x8] sm:$0xff]
        %v650 = vadd.f32 %v642, %v648
        %v651 = vadd.f32 %v643, %v649
        %v652 = vadd.f32 %v644, %v648
        %v653 = vadd.f32 %v645, %v649
        %v654 = vadd.f32 %v646, %v648
        %v655 = vadd.f32 %v647, %v649
        %656 = vadd.xlane.f32.xlu0 %v650
        %v657 = vpop.xlane.xlu0 %656
        %658 = vadd.xlane.f32.xlu0 %v651
        %v659 = vpop.xlane.xlu0 %658
        %660 = vadd.xlane.f32.xlu0 %v652
        %v661 = vpop.xlane.xlu0 %660
        %662 = vadd.xlane.f32.xlu0 %v653
        %v663 = vpop.xlane.xlu0 %662
        %664 = vadd.xlane.f32.xlu0 %v654
        %v665 = vpop.xlane.xlu0 %664
        %666 = vadd.xlane.f32.xlu0 %v655
        %v667 = vpop.xlane.xlu0 %666
        %v668 = vmul.f32 %v650, %v650
        %v669 = vmul.f32 %v651, %v651
        %v670 = vmul.f32 %v652, %v652
        %v671 = vmul.f32 %v653, %v653
        %v672 = vmul.f32 %v654, %v654
        %v673 = vmul.f32 %v655, %v655
        %674 = vadd.xlane.f32.xlu0 %v668
        %v675 = vpop.xlane.xlu0 %674
        %676 = vadd.xlane.f32.xlu0 %v669
        %v677 = vpop.xlane.xlu0 %676
        %678 = vadd.xlane.f32.xlu0 %v670
        %v679 = vpop.xlane.xlu0 %678
        %680 = vadd.xlane.f32.xlu0 %v671
        %v681 = vpop.xlane.xlu0 %680
        %682 = vadd.xlane.f32.xlu0 %v672
        %v683 = vpop.xlane.xlu0 %682
        %684 = vadd.xlane.f32.xlu0 %v673
        %v685 = vpop.xlane.xlu0 %684
        %v686 = vmul.f32 %v657, 0.0078125
        %v687 = vmul.f32 %v659, 0.0078125
        %v688 = vmul.f32 %v661, 0.0078125
        %v689 = vmul.f32 %v663, 0.0078125
        %v690 = vmul.f32 %v665, 0.0078125
        %v691 = vmul.f32 %v667, 0.0078125
        %v692 = vmul.f32 %v675, 0.0078125
        %v693 = vmul.f32 %v677, 0.0078125
        %v694 = vmul.f32 %v679, 0.0078125
        %v695 = vmul.f32 %v681, 0.0078125
        %v696 = vmul.f32 %v683, 0.0078125
        %v697 = vmul.f32 %v685, 0.0078125
        %v698 = vmul.f32 %v686, %v686
        %v699 = vmul.f32 %v687, %v687
        %v700 = vmul.f32 %v688, %v688
        %v701 = vmul.f32 %v689, %v689
        %v702 = vmul.f32 %v690, %v690
        %v703 = vmul.f32 %v691, %v691
        %v704 = vsub.f32 %v692, %v698
        %v705 = vsub.f32 %v693, %v699
        %v706 = vsub.f32 %v694, %v700
        %v707 = vsub.f32 %v695, %v701
        %v708 = vsub.f32 %v696, %v702
        %v709 = vsub.f32 %v697, %v703
        %v710 = vadd.f32 %v704, 1e-05
        %v711 = vadd.f32 %v705, 1e-05
        %v712 = vadd.f32 %v706, 1e-05
        %v713 = vadd.f32 %v707, 1e-05
        %v714 = vadd.f32 %v708, 1e-05
        %v715 = vadd.f32 %v709, 1e-05
        %v716 = vrsqrt.pop %v710
        %v717 = vrsqrt.pop %v711
        %v718 = vrsqrt.pop %v712
        %v719 = vrsqrt.pop %v713
        %v720 = vrsqrt.pop %v714
        %v721 = vrsqrt.pop %v715
        %v722 = vsub.f32 %v650, %v686
        %v723 = vsub.f32 %v651, %v687
        %v724 = vsub.f32 %v652, %v688
        %v725 = vsub.f32 %v653, %v689
        %v726 = vsub.f32 %v654, %v690
        %v727 = vsub.f32 %v655, %v691
        %v728 = vmul.f32 %v722, %v716
        %v729 = vmul.f32 %v723, %v717
        %v730 = vmul.f32 %v724, %v718
        %v731 = vmul.f32 %v725, %v719
        %v732 = vmul.f32 %v726, %v720
        %v733 = vmul.f32 %v727, %v721
        %v734 = vld [vmem:[%s4] sm:$0x1]
        %v736 = vlaneseq
        %v737 = vshrl.u32 %v736, 7
        %v738 = vsub.s32 0, %v737
        %v739 = vrot.slane %v734, %v738
        %v741 = vmul.f32 %v728, %v739
        %v742 = vmul.f32 %v729, %v739
        %v743 = vmul.f32 %v730, %v739
        %v744 = vmul.f32 %v731, %v739
        %v745 = vmul.f32 %v732, %v739
        %v746 = vmul.f32 %v733, %v739
        %v747 = vld [vmem:[%s5] sm:$0x1]
        %v749 = vlaneseq
        %v750 = vshrl.u32 %v749, 7
        %v751 = vsub.s32 0, %v750
        %v752 = vrot.slane %v747, %v751
        %v754 = vadd.f32 %v741, %v752
        %v755 = vadd.f32 %v742, %v752
        %v756 = vadd.f32 %v743, %v752
        %v757 = vadd.f32 %v744, %v752
        %v758 = vadd.f32 %v745, %v752
        %v759 = vadd.f32 %v746, %v752
        %760 = vst [vmem:[%s299] sm:$0xff] %v754
        %761 = vst [vmem:[%s299 + $0x8] sm:$0xff] %v755
        %762 = vst [vmem:[%s299 + $0x10] sm:$0xff] %v756
        %763 = vst [vmem:[%s299 + $0x18] sm:$0xff] %v757
        %764 = vst [vmem:[%s299 + $0x20] sm:$0xff] %v758
        %765 = vst [vmem:[%s299 + $0x28] sm:$0xff] %v759
        %s766 = sand.u32 %s181, 1
        %s767 = scalar_lea.sflag [#allocation4], %s766
        %s768 = sand.u32 %s181, 1
        %s769 = smul.addr %s768, 48
        %s770 = scalar_lea.vmem [#allocation5], %s769
        // Predicated region
        $region49: #{tpu_custom_call.1} parent=43 // pred_check
          %p771 = pneg %p191
        $region50: #{tpu_custom_call.1} parent=43 // pred_check_branch
          %773 = sbr.rel (%p771) target = $region52
        $region51: #{tpu_custom_call.1} parent=43 // pred_region
          %s774 = smul.u32 6, %s26
          %s776 = ssub.s32 768, 768
          %777 = vsyncadd %s767, %s776
          %s778 = smul.addr %s25, 6
          %s779 = sadd.s32 %s774, %s778
          %s780 = smul.addr %s779, 128
          %s781 = scalar_lea.hbm %s6, %s780
          %s782 = sshll.u32 %s770, 4
          %s783 = int_to_ptr.vmem [resolvable:$true] %s782
          %788 = dma.vmem_to_hbm [thread:$0]  %s783, 768, %s781, %s767, 128, 128, 8
        $region52: #{tpu_custom_call.1} parent=43 // pred_fallthru
          _
      $region44: #{tpu_custom_call.1} parent=5 // pred_fallthru
        _
      %p789 = scmp.le.s32.totalorder 2, %s16
      // Predicated region
      $region53: #{tpu_custom_call.1} parent=5 // pred_check
        %p790 = pneg %p789
      $region54: #{tpu_custom_call.1} parent=5 // pred_check_branch
        %792 = sbr.rel (%p790) target = $region56
      $region55: #{tpu_custom_call.1} parent=5 // pred_region
        %s793 = ssub.s32 %s16, 2
        // Predicated region
        $region57: #{tpu_custom_call.1} parent=55 // pred_check
          %p794 = pneg %p197
        $region58: #{tpu_custom_call.1} parent=55 // pred_check_branch
          %796 = sbr.rel (%p794) target = $region60
        $region59: #{tpu_custom_call.1} parent=55 // pred_region
          %s797 = sand.u32 %s182, 1
          %s798 = scalar_lea.sflag [#allocation4], %s797
          %s799 = sand.u32 %s182, 1
          %s800 = smul.addr %s799, 48
          %s801 = scalar_lea.vmem [#allocation5], %s800
          %802 = dma.done %s798, 768
        $region60: #{tpu_custom_call.1} parent=55 // pred_fallthru
          _
      $region56: #{tpu_custom_call.1} parent=5 // pred_fallthru
        _
    $region6: #{tpu_custom_call.1} parent=1 // loop_footer
      %s20 = sadd.s32 1, %s16
    $region7: #{tpu_custom_call.1} parent=1 // loop_footer_branch
      %15 = sbr.rel target = $region3
    $region8: #{tpu_custom_call.1} parent=1 // loop_exit
      _
    %803 = vsyncpa [#allocation3], 1
    %s804 = scalar_lea.sflag [#allocation3], 1
    %805 = vsyncpa %s804, 1
    %806 = vsyncpa [#allocation4], 1
    %s807 = scalar_lea.sflag [#allocation4], 1
    %808 = vsyncpa %s807, 1

</llo_original>
